<compile_context>
chip_gen: v6e
topology: v6e:2x2x1
jax: 0.10.0
libtpu: 0.0.40
codegen_flags: <defaults>
</compile_context>

<pallas_src>
import jax
import jax.numpy as jnp
from jax.experimental import pallas as pl
from jax.experimental.pallas import tpu as pltpu

_LANES = 128


def _identity3_kernel(xp_ref, xh_ref, xf_ref, op_ref, oh_ref, of_ref):
    # Pure pass-through: the GNN forward has no arithmetic.
    op_ref[...] = xp_ref[...]
    oh_ref[...] = xh_ref[...]
    of_ref[...] = xf_ref[...]


def _lane_dense(x):
    """Reshape to a (rows, 128) lane-dense slab when legal; else keep last dim."""
    if x.size % _LANES == 0:
        return x.reshape(x.size // _LANES, _LANES)
    return x.reshape(-1, x.shape[-1])


def _gnn_identity(xp, xh, xf):
    shapes = (xp.shape, xh.shape, xf.shape)
    x2 = (_lane_dense(xp), _lane_dense(xh), _lane_dense(xf))
    vmem = pl.BlockSpec(memory_space=pltpu.MemorySpace.VMEM)
    outs = pl.pallas_call(
        _identity3_kernel,
        out_shape=tuple(jax.ShapeDtypeStruct(t.shape, t.dtype) for t in x2),
        in_specs=[vmem, vmem, vmem],
        out_specs=(vmem, vmem, vmem),
        input_output_aliases={0: 0, 1: 1, 2: 2},
    )(*x2)
    return tuple(o.reshape(s) for o, s in zip(outs, shapes))


# jit the wrapper so the reshapes are layout-only and the aliased buffers are
# internal temporaries (no argument donation, no extra HBM copies, safe reuse
# of the original inputs by the caller).
_gnn_identity_jit = jax.jit(_gnn_identity)


class GNN:
    """JAX/Pallas port of the PyTorch GNN module (identity forward)."""

    def __init__(self, in_dim=256, hidden_dim=10, cls_p=7, cls_h=3, cls_f=2):
        # The PyTorch __init__ only stores dims; there are no parameters.
        self.cp = cls_p
        self.ch = cls_h
        self.cf = cls_f
        self.ch_in = in_dim
        self.hidden = hidden_dim

    def __call__(self, xp, xh, xf):
        return _gnn_identity_jit(xp, xh, xf)


if __name__ == "__main__":
    key = jax.random.PRNGKey(0)
    kp, kh, kf = jax.random.split(key, 3)

    # Small NCHW inputs consistent with cls_p=7, cls_h=3, cls_f=2 channel counts.
    xp = jax.random.normal(kp, (2, 7, 16, 16), dtype=jnp.float32)
    xh = jax.random.normal(kh, (2, 3, 16, 16), dtype=jnp.float32)
    xf = jax.random.normal(kf, (2, 2, 16, 16), dtype=jnp.float32)

    gnn = GNN(in_dim=256, hidden_dim=10, cls_p=7, cls_h=3, cls_f=2)
    op, oh, of = gnn(xp, xh, xf)
    jax.block_until_ready((op, oh, of))

    assert op.shape == xp.shape and oh.shape == xh.shape and of.shape == xf.shape
    assert jnp.allclose(op, xp) and jnp.allclose(oh, xh) and jnp.allclose(of, xf)

    print("KERNEL_OK")
</pallas_src>

<mosaic_0001>
module attributes {stable_mosaic.version = 11 : i64} {
  func.func @_identity3_kernel(%arg0: memref<28x128xf32, #tpu.memory_space<vmem>>, %arg1: memref<12x128xf32, #tpu.memory_space<vmem>>, %arg2: memref<8x128xf32, #tpu.memory_space<vmem>>, %arg3: memref<28x128xf32, #tpu.memory_space<vmem>>, %arg4: memref<12x128xf32, #tpu.memory_space<vmem>>, %arg5: memref<8x128xf32, #tpu.memory_space<vmem>>) attributes {dimension_semantics = [], scalar_prefetch = 0 : i64, scratch_operands = 0 : i64, tpu.core_type = #tpu.core_type<tc>} {
    %c0 = arith.constant 0 : index
    %c0_0 = arith.constant 0 : index
    %0 = vector.load %arg0[%c0, %c0_0] : memref<28x128xf32, #tpu.memory_space<vmem>>, vector<28x128xf32>
    %c0_1 = arith.constant 0 : index
    %c0_2 = arith.constant 0 : index
    %1 = vector.load %arg3[%c0_1, %c0_2] : memref<28x128xf32, #tpu.memory_space<vmem>>, vector<28x128xf32>
    tpu.vector_store %arg3[%c0_1, %c0_2], %0 {strides = array<i32>} : memref<28x128xf32, #tpu.memory_space<vmem>>, vector<28x128xf32>,
    %c0_3 = arith.constant 0 : index
    %c0_4 = arith.constant 0 : index
    %2 = vector.load %arg1[%c0_3, %c0_4] : memref<12x128xf32, #tpu.memory_space<vmem>>, vector<12x128xf32>
    %c0_5 = arith.constant 0 : index
    %c0_6 = arith.constant 0 : index
    %3 = vector.load %arg4[%c0_5, %c0_6] : memref<12x128xf32, #tpu.memory_space<vmem>>, vector<12x128xf32>
    tpu.vector_store %arg4[%c0_5, %c0_6], %2 {strides = array<i32>} : memref<12x128xf32, #tpu.memory_space<vmem>>, vector<12x128xf32>,
    %c0_7 = arith.constant 0 : index
    %c0_8 = arith.constant 0 : index
    %4 = vector.load %arg2[%c0_7, %c0_8] : memref<8x128xf32, #tpu.memory_space<vmem>>, vector<8x128xf32>
    %c0_9 = arith.constant 0 : index
    %c0_10 = arith.constant 0 : index
    %5 = vector.load %arg5[%c0_9, %c0_10] : memref<8x128xf32, #tpu.memory_space<vmem>>, vector<8x128xf32>
    tpu.vector_store %arg5[%c0_9, %c0_10], %4 {strides = array<i32>} : memref<8x128xf32, #tpu.memory_space<vmem>>, vector<8x128xf32>,
    return
  }
}

</mosaic_0001>

<llo_original>
// kernel: _gnn_identity.1
$region0: #{_gnn_identity.1}
  #allocation0 [shape = 'u32[]', space=smem, size = 0x4, offset = 0x4, fixed_abs, tag = 'smem constant byte address 0x4 - core index']
  #allocation1 [shape = 'u32[144,128]{1,0:T(1,128)}', space=vmem, size = 0x12000, scoped, tag = 'internal scratch']
  %s0 = inlined_call_operand.vmem [shape: f32[28,128], index: 0, kind: input, shape index: {}, may-alias: {0,3}]
  %s1 = inlined_call_operand.vmem [shape: f32[12,128], index: 1, kind: input, shape index: {}, may-alias: {1,4}]
  %s2 = inlined_call_operand.vmem [shape: f32[8,128], index: 2, kind: input, shape index: {}, may-alias: {2,5}]
  %s3 = inlined_call_operand.vmem [shape: f32[28,128], index: 3, kind: output, shape index: {0}, may-alias: {0,3}]
  %s4 = inlined_call_operand.vmem [shape: f32[12,128], index: 4, kind: output, shape index: {1}, may-alias: {1,4}]
  %s5 = inlined_call_operand.vmem [shape: f32[8,128], index: 5, kind: output, shape index: {2}, may-alias: {2,5}]
  %6 = xla_tuple %s3, %s4, %s5
  %s7 = sld [smem:[#allocation0]]
  $region38: #{_gnn_identity.1} parent=0
    _
  %s9 = ssub.s32 1, %s7
  %s10 = scalar_select 0, %s9, %s7
  // Predicated region
  $region2: #{_gnn_identity.1} parent=0 // pred_check
    _
  $region3: #{_gnn_identity.1} parent=0 // pred_check_branch
    %12 = sbr.rel (0) target = $region5
  $region4: #{_gnn_identity.1} parent=0 // pred_region
    _
  $region5: #{_gnn_identity.1} parent=0 // pred_fallthru
    _
  // Predicated region
  $region6: #{_gnn_identity.1} parent=0 // pred_check
    _
  $region7: #{_gnn_identity.1} parent=0 // pred_check_branch
    %14 = sbr.rel (0) target = $region9
  $region8: #{_gnn_identity.1} parent=0 // pred_region
    _
  $region9: #{_gnn_identity.1} parent=0 // pred_fallthru
    _
  // Predicated region
  $region10: #{_gnn_identity.1} parent=0 // pred_check
    _
  $region11: #{_gnn_identity.1} parent=0 // pred_check_branch
    %16 = sbr.rel (0) target = $region13
  $region12: #{_gnn_identity.1} parent=0 // pred_region
    _
  $region13: #{_gnn_identity.1} parent=0 // pred_fallthru
    _
  %v17 = vld [vmem:[%s0] sm:$0xff]
  %v18 = vld [vmem:[%s0 + $0x8] sm:$0xff]
  %v19 = vld [vmem:[%s0 + $0x10] sm:$0xff]
  %v20 = vld [vmem:[%s0 + $0x18] sm:$0xf]
  %21 = vst [vmem:[%s3] sm:$0xff] %v17
  %22 = vst [vmem:[%s3 + $0x8] sm:$0xff] %v18
  %23 = vst [vmem:[%s3 + $0x10] sm:$0xff] %v19
  %24 = vst [vmem:[%s3 + $0x18] sm:$0xf] %v20
  %v25 = vld [vmem:[%s1] sm:$0xff]
  %v26 = vld [vmem:[%s1 + $0x8] sm:$0xf]
  %27 = vst [vmem:[%s4] sm:$0xff] %v25
  %28 = vst [vmem:[%s4 + $0x8] sm:$0xf] %v26
  %v29 = vld [vmem:[%s2] sm:$0xff]
  %30 = vst [vmem:[%s5] sm:$0xff] %v29
  // Predicated region
  $region14: #{_gnn_identity.1} parent=0 // pred_check
    _
  $region15: #{_gnn_identity.1} parent=0 // pred_check_branch
    %32 = sbr.rel (0) target = $region17
  $region16: #{_gnn_identity.1} parent=0 // pred_region
    _
  $region17: #{_gnn_identity.1} parent=0 // pred_fallthru
    _
  // Predicated region
  $region18: #{_gnn_identity.1} parent=0 // pred_check
    _
  $region19: #{_gnn_identity.1} parent=0 // pred_check_branch
    %34 = sbr.rel (0) target = $region21
  $region20: #{_gnn_identity.1} parent=0 // pred_region
    _
  $region21: #{_gnn_identity.1} parent=0 // pred_fallthru
    _
  // Predicated region
  $region22: #{_gnn_identity.1} parent=0 // pred_check
    _
  $region23: #{_gnn_identity.1} parent=0 // pred_check_branch
    %36 = sbr.rel (0) target = $region25
  $region24: #{_gnn_identity.1} parent=0 // pred_region
    _
  $region25: #{_gnn_identity.1} parent=0 // pred_fallthru
    _
  // Predicated region
  $region26: #{_gnn_identity.1} parent=0 // pred_check
    _
  $region27: #{_gnn_identity.1} parent=0 // pred_check_branch
    %38 = sbr.rel (0) target = $region29
  $region28: #{_gnn_identity.1} parent=0 // pred_region
    _
  $region29: #{_gnn_identity.1} parent=0 // pred_fallthru
    _
  // Predicated region
  $region30: #{_gnn_identity.1} parent=0 // pred_check
    _
  $region31: #{_gnn_identity.1} parent=0 // pred_check_branch
    %40 = sbr.rel (0) target = $region33
  $region32: #{_gnn_identity.1} parent=0 // pred_region
    _
  $region33: #{_gnn_identity.1} parent=0 // pred_fallthru
    _
  // Predicated region
  $region34: #{_gnn_identity.1} parent=0 // pred_check
    _
  $region35: #{_gnn_identity.1} parent=0 // pred_check_branch
    %42 = sbr.rel (0) target = $region37
  $region36: #{_gnn_identity.1} parent=0 // pred_region
    _
  $region37: #{_gnn_identity.1} parent=0 // pred_fallthru
    _

</llo_original>
